<compile_context>
chip_gen: v7x
topology: tpu7x:2x2x1
jax: 0.10.0
libtpu: 0.0.40
codegen_flags: <defaults>
</compile_context>

<pallas_src>
import jax
import jax.numpy as jnp
from jax.experimental import pallas as pl
from jax.experimental.pallas import tpu as pltpu


def _vmem_capacity_bytes():
    """Physical VMEM per TensorCore; conservative fallback if the query fails."""
    try:
        info = pltpu.get_tpu_info()
        cap = getattr(info, "vmem_capacity_bytes", None)
        if cap:
            return int(cap)
    except Exception:
        pass
    return 64 << 20  # v7x per-core VMEM; safe lower bound for v5e/v6e too


def _choose_blocks(n_prompts, n_cls, n_ctx, l_suf, l_total, d,
                   out_itemsize, in_itemsize, budget_bytes):
    """Pick (p_blk, c_blk) purely by VMEM budget (no divisor constraint)."""

    def working(p_blk, c_blk):
        return (
            2 * p_blk * c_blk * l_total * d * out_itemsize   # double-buffered out block
            + 2 * c_blk * d * in_itemsize                    # double-buffered prefix block
            + 2 * c_blk * l_suf * d * in_itemsize            # double-buffered suffix block
            + 2 * n_ctx * d * in_itemsize                    # ctx block (constant index)
        )

    # Class-block candidates (largest first) that keep the (8,128) tiling rule:
    # either the full class axis, or a multiple of 8 sublanes (partial last
    # block is masked by Pallas).
    c_cands = [n_cls] + list(range((n_cls - 1) // 8 * 8, 0, -8))

    choice = None
    for p_blk in range(n_prompts, 0, -1):        # prefer folding all prompts
        for c_blk in c_cands:                    # then the biggest class block
            if working(p_blk, c_blk) <= budget_bytes:
                choice = (p_blk, c_blk)
                break
        if choice is not None:
            break
    if choice is None:
        # Even the smallest legal block exceeds the budget; take it anyway and
        # let vmem_limit_bytes absorb it.
        choice = (1, c_cands[-1])
    p_blk, c_blk = choice

    # Make sure the parallel grid has >= 2 cells when the problem allows it,
    # so v7x's second TensorCore gets work (costs ~one extra grid step on
    # single-core chips -- negligible for a memcpy-bound op).
    if pl.cdiv(n_prompts, p_blk) * pl.cdiv(n_cls, c_blk) < 2:
        if n_prompts >= 2:
            p_blk = pl.cdiv(n_prompts, 2)
        else:
            for c in c_cands:
                if pl.cdiv(n_cls, c) >= 2:
                    c_blk = c
                    break

    return p_blk, c_blk, working(p_blk, c_blk)


def _make_kernel(p_blk, c_blk, d, n_ctx, l_suf):
    d_ctx = n_ctx * d
    d_suf = l_suf * d

    def kernel(prefix_ref, ctx_ref, suffix_ref, out_ref):
        # prefix_ref: (c_blk, D)         ctx_ref: (1, n_ctx*D)
        # suffix_ref: (c_blk, L_suf*D)   out_ref: (p_blk, c_blk, L_total*D)
        odt = out_ref.dtype
        # Three lane-dense stores at D-aligned lane offsets; broadcast over the
        # prompt (and, for ctx, the class) axes happens in-register/VMEM.
        out_ref[:, :, 0:d] = jnp.broadcast_to(
            prefix_ref[...].astype(odt)[None], (p_blk, c_blk, d))
        out_ref[:, :, d:d + d_ctx] = jnp.broadcast_to(
            ctx_ref[...].astype(odt)[None], (p_blk, c_blk, d_ctx))
        out_ref[:, :, d + d_ctx:] = jnp.broadcast_to(
            suffix_ref[...].astype(odt)[None], (p_blk, c_blk, d_suf))

    return kernel


def prompt_learner_forward(ctx, token_prefix, token_suffix, n_prompts,
                           out_dtype=None):
    """Pallas implementation of PromptLearner.forward() ('end' position, 2-D ctx).

    ctx:          (n_ctx, D)
    token_prefix: (n_cls, 1, D)
    token_suffix: (n_cls, L_suf, D)
    returns:      (n_prompts, n_cls, 1 + n_ctx + L_suf, D)
    """
    n_ctx, d = ctx.shape
    n_cls, one, dp = token_prefix.shape
    assert one == 1 and dp == d
    _, l_suf, ds = token_suffix.shape
    assert ds == d and l_suf >= 1
    l_total = 1 + n_ctx + l_suf
    ld = l_total * d

    out_dtype = ctx.dtype if out_dtype is None else jnp.dtype(out_dtype)
    out_isz = jnp.dtype(out_dtype).itemsize
    in_isz = jnp.dtype(ctx.dtype).itemsize

    vmem_cap = _vmem_capacity_bytes()
    budget = max(8 << 20, (vmem_cap * 3) // 8)      # ~48 MiB v5e/v6e, ~24 MiB v7x
    p_blk, c_blk, working = _choose_blocks(
        n_prompts, n_cls, n_ctx, l_suf, l_total, d, out_isz, in_isz, budget)
    n_pb = pl.cdiv(n_prompts, p_blk)
    n_cb = pl.cdiv(n_cls, c_blk)
    vmem_limit = int(min(max(2 * working, 16 << 20), (vmem_cap * 3) // 4))

    # Lane-dense flattened views (free reshapes on contiguous arrays).
    # Note: if D is not a multiple of 128 the kernel is still correct, just
    # with masked lane boundaries.
    prefix_flat = token_prefix.reshape(n_cls, d)
    suffix_flat = token_suffix.reshape(n_cls, l_suf * d)
    ctx_flat = ctx.reshape(1, n_ctx * d)

    out_bytes = n_prompts * n_cls * ld * out_isz
    in_bytes = (n_cls * d + n_cls * l_suf * d + n_ctx * d) * in_isz

    kernel = _make_kernel(p_blk, c_blk, d, n_ctx, l_suf)

    out_flat = pl.pallas_call(
        kernel,
        out_shape=jax.ShapeDtypeStruct((n_prompts, n_cls, ld), out_dtype),
        grid_spec=pltpu.PrefetchScalarGridSpec(
            num_scalar_prefetch=0,
            grid=(n_pb, n_cb),
            in_specs=[
                pl.BlockSpec((c_blk, d), lambda p, c: (c, 0)),
                pl.BlockSpec((1, n_ctx * d), lambda p, c: (0, 0)),
                pl.BlockSpec((c_blk, l_suf * d), lambda p, c: (c, 0)),
            ],
            out_specs=pl.BlockSpec((p_blk, c_blk, ld), lambda p, c: (p, c, 0)),
        ),
        compiler_params=pltpu.CompilerParams(
            dimension_semantics=("parallel", "parallel"),
            vmem_limit_bytes=vmem_limit,
        ),
        cost_estimate=pl.CostEstimate(
            flops=0, transcendentals=0, bytes_accessed=out_bytes + in_bytes),
    )(prefix_flat, ctx_flat, suffix_flat)

    return out_flat.reshape(n_prompts, n_cls, l_total, d)


def reference_forward(ctx, token_prefix, token_suffix, n_prompts):
    """Plain-JAX reference mirroring the PyTorch forward ('end' position)."""
    n_cls = token_prefix.shape[0]
    n_ctx, d = ctx.shape
    ctx_e = jnp.broadcast_to(ctx[None, None], (n_prompts, n_cls, n_ctx, d))
    prefix_e = jnp.broadcast_to(
        token_prefix[None], (n_prompts, n_cls) + token_prefix.shape[1:])
    suffix_e = jnp.broadcast_to(
        token_suffix[None], (n_prompts, n_cls) + token_suffix.shape[1:])
    return jnp.concatenate([prefix_e, ctx_e, suffix_e], axis=2)


# TODO(synk): 'middle'/'front' class_token_position branches (ragged per-class
# splits driven by tokenizer name_lens) are not implemented; the module's
# default path is 'end'.

if __name__ == "__main__":
    # Deterministic synthetic parameters (no CLIP checkpoint / tokenizer):
    #   n_prompts=3, n_cls=4 classes, n_ctx=4 ("a video of action"), ctx_dim=128
    #   total token length = 16  ->  suffix length = 16 - 1 - 4 = 11
    n_prompts = 3
    n_cls = 4
    n_ctx = 4
    ctx_dim = 128
    seq_len = 16
    l_suf = seq_len - 1 - n_ctx

    key = jax.random.PRNGKey(0)
    k_ctx, k_pre, k_suf = jax.random.split(key, 3)

    ctx = (0.02 * jax.random.normal(k_ctx, (n_ctx, ctx_dim))).astype(jnp.float32)
    token_prefix = (0.02 * jax.random.normal(k_pre, (n_cls, 1, ctx_dim))).astype(
        jnp.float32)
    token_suffix = (0.02 * jax.random.normal(k_suf, (n_cls, l_suf, ctx_dim))).astype(
        jnp.float32)

    out = prompt_learner_forward(ctx, token_prefix, token_suffix, n_prompts)
    out = jax.block_until_ready(out)

    ref = reference_forward(ctx, token_prefix, token_suffix, n_prompts)
    assert out.shape == (n_prompts, n_cls, seq_len, ctx_dim), out.shape
    assert out.dtype == jnp.float32
    assert jnp.array_equal(out, ref), "mismatch vs reference"

    print("KERNEL_OK")
</pallas_src>

<mosaic_0001>
module attributes {stable_mosaic.version = 11 : i64} {
  func.func @kernel(%arg0: i32, %arg1: i32, %arg2: memref<4x128xf32, #tpu.memory_space<vmem>>, %arg3: memref<1x512xf32, #tpu.memory_space<vmem>>, %arg4: memref<4x1408xf32, #tpu.memory_space<vmem>>, %arg5: memref<2x4x2048xf32, #tpu.memory_space<vmem>>) attributes {dimension_semantics = [#tpu.dimension_semantics<parallel>, #tpu.dimension_semantics<parallel>], iteration_bounds = array<i64: 2, 1>, scalar_prefetch = 0 : i64, scratch_operands = 0 : i64, tpu.core_type = #tpu.core_type<tc>, window_params = [{transform_indices = @transform_0, window_bounds = array<i64: 4, 128>}, {pipeline_mode = #tpu.pipeline_mode<synchronous>, transform_indices = @transform_1, window_bounds = array<i64: 1, 512>}, {transform_indices = @transform_2, window_bounds = array<i64: 4, 1408>}, {transform_indices = @transform_3, window_bounds = array<i64: 2, 4, 2048>}]} {
    %c0 = arith.constant 0 : index
    %c0_0 = arith.constant 0 : index
    %0 = vector.load %arg2[%c0, %c0_0] : memref<4x128xf32, #tpu.memory_space<vmem>>, vector<4x128xf32>
    %1 = vector.shape_cast %0 : vector<4x128xf32> to vector<1x4x128xf32>
    %2 = vector.shape_cast %1 : vector<1x4x128xf32> to vector<1x4x128xf32>
    %3 = vector.broadcast %2 : vector<1x4x128xf32> to vector<2x4x128xf32>
    %c0_1 = arith.constant 0 : index
    %c0_2 = arith.constant 0 : index
    %c0_3 = arith.constant 0 : index
    %4 = vector.load %arg5[%c0_1, %c0_2, %c0_3] : memref<2x4x2048xf32, #tpu.memory_space<vmem>>, vector<2x4x128xf32>
    tpu.vector_store %arg5[%c0_1, %c0_2, %c0_3], %3 {strides = array<i32>} : memref<2x4x2048xf32, #tpu.memory_space<vmem>>, vector<2x4x128xf32>,
    %c0_4 = arith.constant 0 : index
    %c0_5 = arith.constant 0 : index
    %5 = vector.load %arg3[%c0_4, %c0_5] : memref<1x512xf32, #tpu.memory_space<vmem>>, vector<1x512xf32>
    %6 = vector.shape_cast %5 : vector<1x512xf32> to vector<1x1x512xf32>
    %7 = vector.shape_cast %6 : vector<1x1x512xf32> to vector<1x1x512xf32>
    %8 = vector.broadcast %7 : vector<1x1x512xf32> to vector<2x4x512xf32>
    %c0_6 = arith.constant 0 : index
    %c0_7 = arith.constant 0 : index
    %c128 = arith.constant 128 : index
    %9 = vector.load %arg5[%c0_6, %c0_7, %c128] : memref<2x4x2048xf32, #tpu.memory_space<vmem>>, vector<2x4x512xf32>
    tpu.vector_store %arg5[%c0_6, %c0_7, %c128], %8 {strides = array<i32>} : memref<2x4x2048xf32, #tpu.memory_space<vmem>>, vector<2x4x512xf32>,
    %c0_8 = arith.constant 0 : index
    %c0_9 = arith.constant 0 : index
    %10 = vector.load %arg4[%c0_8, %c0_9] : memref<4x1408xf32, #tpu.memory_space<vmem>>, vector<4x1408xf32>
    %11 = vector.shape_cast %10 : vector<4x1408xf32> to vector<1x4x1408xf32>
    %12 = vector.shape_cast %11 : vector<1x4x1408xf32> to vector<1x4x1408xf32>
    %13 = vector.broadcast %12 : vector<1x4x1408xf32> to vector<2x4x1408xf32>
    %c0_10 = arith.constant 0 : index
    %c0_11 = arith.constant 0 : index
    %c640 = arith.constant 640 : index
    %14 = vector.load %arg5[%c0_10, %c0_11, %c640] : memref<2x4x2048xf32, #tpu.memory_space<vmem>>, vector<2x4x1408xf32>
    tpu.vector_store %arg5[%c0_10, %c0_11, %c640], %13 {strides = array<i32>} : memref<2x4x2048xf32, #tpu.memory_space<vmem>>, vector<2x4x1408xf32>,
    return
  }
  func.func @transform_0(%arg0: i32, %arg1: i32) -> (i32, i32) {
    %c0_i32 = arith.constant 0 : i32
    %c0_i32_0 = arith.constant 0 : i32
    return %arg1, %c0_i32 : i32, i32
  }
  func.func @transform_1(%arg0: i32, %arg1: i32) -> (i32, i32) {
    %c0_i32 = arith.constant 0 : i32
    %c0_i32_0 = arith.constant 0 : i32
    %c0_i32_1 = arith.constant 0 : i32
    return %c0_i32, %c0_i32_0 : i32, i32
  }
  func.func @transform_2(%arg0: i32, %arg1: i32) -> (i32, i32) {
    %c0_i32 = arith.constant 0 : i32
    %c0_i32_0 = arith.constant 0 : i32
    return %arg1, %c0_i32 : i32, i32
  }
  func.func @transform_3(%arg0: i32, %arg1: i32) -> (i32, i32, i32) {
    %c0_i32 = arith.constant 0 : i32
    %c0_i32_0 = arith.constant 0 : i32
    return %arg0, %arg1, %c0_i32 : i32, i32, i32
  }
}

</mosaic_0001>

<llo_original>
// kernel: tpu_custom_call.1
$region0: #{tpu_custom_call.1}
  #allocation0 [shape = 'u32[]', space=smem, size = 0x4, offset = 0x4, fixed_abs, tag = 'smem constant byte address 0x4 - core index']
  #allocation1 [shape = 'u32[144,128]{1,0:T(1,128)}', space=vmem, size = 0x12000, scoped, tag = 'internal scratch']
  %s0 = inlined_call_operand.hbm [shape: f32[4,128], index: 0, kind: input, shape index: {}]
  %s1 = inlined_call_operand.hbm [shape: f32[1,512], index: 1, kind: input, shape index: {}]
  %s2 = inlined_call_operand.hbm [shape: f32[4,1408], index: 2, kind: input, shape index: {}]
  %s3 = inlined_call_operand.hbm [shape: f32[3,4,2048], index: 3, kind: output, shape index: {}]
  %s4 = sld [smem:[#allocation0]]
  $region57: #{tpu_custom_call.1} parent=0
    _
  %s6 = ssub.s32 1, %s4
  %s7 = scalar_select 0, %s6, %s4
  $region1: #{tpu_custom_call.1} parent=0
    #allocation2 [shape = 'u8[2048]{0}', space=vmem, size = 0x800, scoped, tag = 'input window, operand 0, single buffered']
    #allocation3 [shape = 's32[2]{0}', space=sflag, size = 0x8, scoped, tag = 'scoped memory for tpu_custom_call.1']
    #allocation4 [shape = 's32[2]{0}', space=sflag, size = 0x8, scoped, tag = 'scoped memory for tpu_custom_call.1']
    #allocation5 [shape = 'u8[2048]{0}', space=vmem, size = 0x800, scoped, tag = 'input window, operand 1, single buffered']
    #allocation6 [shape = 's32[1]{0}', space=sflag, size = 0x4, scoped, tag = 'scoped memory for tpu_custom_call.1']
    #allocation7 [shape = 'u8[22528]{0}', space=vmem, size = 0x5800, scoped, tag = 'input window, operand 2, single buffered']
    #allocation8 [shape = 'u8[131072]{0}', space=vmem, size = 0x20000, scoped, tag = 'output window, operand 0']
    %8 = vsyncpa [#allocation3], 0
    %9 = vsyncpa [#allocation6], 0
    %10 = vsyncpa [#allocation4], 0
    %s11 = scalar_lea.sflag [#allocation4], 1
    %12 = vsyncpa %s11, 0
    loop: start=0, step=1, limit=4
    $region2: #{tpu_custom_call.1} parent=1 // loop_pre_header
      _
    $region3: #{tpu_custom_call.1} parent=1 // loop_header
      %s14 = sphi 0, %s18
      %p15 = scmp.ge.s32.totalorder %s14, 4
      %s21 = sphi 0, %s33
      %s22 = sphi 0, %s29
      %s23 = sphi 0, %s21
      %s24 = sphi 0, %s22
      %s25 = sphi 0, %s23
      %s26 = sphi 0, %s24
      %s36 = sphi 0, %s38
      %s39 = sphi 0, %s36
      %s40 = sphi 0, %s39
      %s56 = sphi 0, %s40
      %s60 = sphi 0, %s60
      %s62 = sphi 0, %s60
      %s63 = sphi 0, %s62
      %s77 = sphi 0, %s63
      %s83 = sphi 0, %s85
      %s86 = sphi 0, %s83
      %s87 = sphi 0, %s86
      %s103 = sphi 0, %s87
      %s111 = sphi 0, %s113
      %s114 = sphi 0, %s111
      %s115 = sphi 0, %s114
      %s131 = sphi 0, %s115
    $region4: #{tpu_custom_call.1} parent=1 // loop_header_branch
      %17 = sbr.rel (%p15) target = $region8
    $region5: #{tpu_custom_call.1} parent=1 // loop_body
      %s19 = ssub.s32 %s14, 1
      %s20 = ssub.s32 %s14, 2
      %s27 = sadd.s32 1, %s22
      %p28 = scmp.ge.s32.totalorder %s27, 1
      %s29 = scalar_select %p28, 0, %s27
      %s30 = sadd.s32 1, %s21
      %s31 = scalar_select %p28, %s30, %s21
      %p32 = scmp.ge.s32.totalorder %s31, 2
      %s33 = scalar_select %p32, 0, %s31
      %s34 = ssub.s32 %s22, %s29
      %p35 = scmp.eq.s32.totalorder %s34, 0
      %s37 = sadd.s32 %s36, 1
      %s38 = scalar_select %p35, %s36, %s37
      %p41 = pneg %p35
      %p42 = scmp.eq.s32.totalorder %s14, 1
      %p43 = por %p41, %p42
      %p44 = scmp.ne.s32.totalorder %s36, %s39
      %p45 = scmp.eq.s32.totalorder %s14, 0
      %p46 = por %p44, %p45
      %p47 = scmp.ne.s32.totalorder %s36, %s39
      %p48 = scmp.eq.s32.totalorder %s19, 1
      %p49 = por %p47, %p48
      %p50 = scmp.ne.s32.totalorder %s39, %s40
      %p51 = scmp.eq.s32.totalorder %s19, 0
      %p52 = por %p50, %p51
      %p53 = scmp.ne.s32.totalorder %s39, %s40
      %p54 = scmp.eq.s32.totalorder %s20, 1
      %p55 = por %p53, %p54
      %p57 = scmp.ne.s32.totalorder %s40, %s56
      %p58 = scmp.eq.s32.totalorder %s20, 0
      %p59 = por %p57, %p58
      %s61 = sadd.s32 %s60, 1
      %p64 = scmp.eq.s32.totalorder %s14, 1
      %p65 = scmp.ne.s32.totalorder %s60, %s62
      %p66 = scmp.eq.s32.totalorder %s14, 0
      %p67 = por %p65, %p66
      %p68 = scmp.ne.s32.totalorder %s60, %s62
      %p69 = scmp.eq.s32.totalorder %s19, 1
      %p70 = por %p68, %p69
      %p71 = scmp.ne.s32.totalorder %s62, %s63
      %p72 = scmp.eq.s32.totalorder %s19, 0
      %p73 = por %p71, %p72
      %p74 = scmp.ne.s32.totalorder %s62, %s63
      %p75 = scmp.eq.s32.totalorder %s20, 1
      %p76 = por %p74, %p75
      %p78 = scmp.ne.s32.totalorder %s63, %s77
      %p79 = scmp.eq.s32.totalorder %s20, 0
      %p80 = por %p78, %p79
      %s81 = ssub.s32 %s22, %s29
      %p82 = scmp.eq.s32.totalorder %s81, 0
      %s84 = sadd.s32 %s83, 1
      %s85 = scalar_select %p82, %s83, %s84
      %p88 = pneg %p82
      %p89 = scmp.eq.s32.totalorder %s14, 1
      %p90 = por %p88, %p89
      %p91 = scmp.ne.s32.totalorder %s83, %s86
      %p92 = scmp.eq.s32.totalorder %s14, 0
      %p93 = por %p91, %p92
      %p94 = scmp.ne.s32.totalorder %s83, %s86
      %p95 = scmp.eq.s32.totalorder %s19, 1
      %p96 = por %p94, %p95
      %p97 = scmp.ne.s32.totalorder %s86, %s87
      %p98 = scmp.eq.s32.totalorder %s19, 0
      %p99 = por %p97, %p98
      %p100 = scmp.ne.s32.totalorder %s86, %s87
      %p101 = scmp.eq.s32.totalorder %s20, 1
      %p102 = por %p100, %p101
      %p104 = scmp.ne.s32.totalorder %s87, %s103
      %p105 = scmp.eq.s32.totalorder %s20, 0
      %p106 = por %p104, %p105
      %s107 = ssub.s32 %s21, %s33
      %s108 = ssub.s32 %s22, %s29
      %s109 = sor.u32 %s107, %s108
      %p110 = scmp.eq.s32.totalorder %s109, 0
      %s112 = sadd.s32 %s111, 1
      %s113 = scalar_select %p110, %s111, %s112
      %p116 = pneg %p110
      %p117 = scmp.eq.s32.totalorder %s14, 1
      %p118 = por %p116, %p117
      %p119 = scmp.ne.s32.totalorder %s111, %s114
      %p120 = scmp.eq.s32.totalorder %s14, 0
      %p121 = por %p119, %p120
      %p122 = scmp.ne.s32.totalorder %s111, %s114
      %p123 = scmp.eq.s32.totalorder %s19, 1
      %p124 = por %p122, %p123
      %p125 = scmp.ne.s32.totalorder %s114, %s115
      %p126 = scmp.eq.s32.totalorder %s19, 0
      %p127 = por %p125, %p126
      %p128 = scmp.ne.s32.totalorder %s114, %s115
      %p129 = scmp.eq.s32.totalorder %s20, 1
      %p130 = por %p128, %p129
      %p132 = scmp.ne.s32.totalorder %s115, %s131
      %p133 = scmp.eq.s32.totalorder %s20, 0
      %p134 = por %p132, %p133
      %p135 = scmp.le.s32.totalorder 1, %s14
      %p136 = scmp.lt.s32.totalorder %s14, 3
      %p137 = pnand %p135, %p136
      %p138 = pneg %p137
      // Predicated region
      $region9: #{tpu_custom_call.1} parent=5 // pred_check
        _
      $region10: #{tpu_custom_call.1} parent=5 // pred_check_branch
        %140 = sbr.rel (%p137) target = $region12
      $region11: #{tpu_custom_call.1} parent=5 // pred_region
        %s141 = ssub.s32 %s14, 1
        // Predicated region
        $region13: #{tpu_custom_call.1} parent=11 // pred_check
          %p142 = pneg %p52
        $region14: #{tpu_custom_call.1} parent=11 // pred_check_branch
          %144 = sbr.rel (%p142) target = $region16
        $region15: #{tpu_custom_call.1} parent=11 // pred_region
          %s146 = ssub.s32 64, 64
          %147 = vsyncadd [#allocation3], %s146
          %s148 = smul.addr %s24, 64
          %s149 = scalar_lea.hbm %s0, %s148
          %s151 = sshll.u32 [#allocation2], 4
          %s152 = int_to_ptr.vmem [resolvable:$true] %s151
          %154 = dma.hbm_to_vmem [thread:$0]  %s149, 64, %s152, [#allocation3]
        $region16: #{tpu_custom_call.1} parent=11 // pred_fallthru
          _
        // Predicated region
        $region17: #{tpu_custom_call.1} parent=11 // pred_check
          %p155 = pneg %p73
        $region18: #{tpu_custom_call.1} parent=11 // pred_check_branch
          %157 = sbr.rel (%p155) target = $region20
        $region19: #{tpu_custom_call.1} parent=11 // pred_region
          %s159 = ssub.s32 64, 64
          %160 = vsyncadd [#allocation6], %s159
          %s162 = sshll.u32 [#allocation5], 4
          %s163 = int_to_ptr.vmem [resolvable:$true] %s162
          %165 = dma.hbm_to_vmem [thread:$0]  %s1, 64, %s163, [#allocation6]
        $region20: #{tpu_custom_call.1} parent=11 // pred_fallthru
          _
        // Predicated region
        $region21: #{tpu_custom_call.1} parent=11 // pred_check
          %p166 = pneg %p99
        $region22: #{tpu_custom_call.1} parent=11 // pred_check_branch
          %168 = sbr.rel (%p166) target = $region24
        $region23: #{tpu_custom_call.1} parent=11 // pred_region
          %s170 = ssub.s32 704, 704
          %171 = vsyncadd [#allocation6], %s170
          %s172 = smul.addr %s24, 11
          %s173 = smul.addr %s172, 64
          %s174 = scalar_lea.hbm %s2, %s173
          %s176 = sshll.u32 [#allocation7], 4
          %s177 = int_to_ptr.vmem [resolvable:$true] %s176
          %179 = dma.hbm_to_vmem [thread:$0]  %s174, 704, %s177, [#allocation6]
        $region24: #{tpu_custom_call.1} parent=11 // pred_fallthru
          _
      $region12: #{tpu_custom_call.1} parent=5 // pred_fallthru
        _
      %p180 = scmp.lt.s32.totalorder %s14, 2
      // Predicated region
      $region25: #{tpu_custom_call.1} parent=5 // pred_check
        %p181 = pneg %p180
      $region26: #{tpu_custom_call.1} parent=5 // pred_check_branch
        %183 = sbr.rel (%p181) target = $region28
      $region27: #{tpu_custom_call.1} parent=5 // pred_region
        _
      $region28: #{tpu_custom_call.1} parent=5 // pred_fallthru
        _
      %p184 = scmp.le.s32.totalorder 1, %s14
      %p185 = scmp.lt.s32.totalorder %s14, 3
      %p186 = pnand %p184, %p185
      %p187 = pneg %p186
      // Predicated region
      $region29: #{tpu_custom_call.1} parent=5 // pred_check
        _
      $region30: #{tpu_custom_call.1} parent=5 // pred_check_branch
        %189 = sbr.rel (%p186) target = $region32
      $region31: #{tpu_custom_call.1} parent=5 // pred_region
        %s190 = ssub.s32 %s14, 1
        // Predicated region
        $region33: #{tpu_custom_call.1} parent=31 // pred_check
          %p191 = pneg %p52
        $region34: #{tpu_custom_call.1} parent=31 // pred_check_branch
          %193 = sbr.rel (%p191) target = $region36
        $region35: #{tpu_custom_call.1} parent=31 // pred_region
          %194 = dma.done [#allocation3], 64
        $region36: #{tpu_custom_call.1} parent=31 // pred_fallthru
          _
        // Predicated region
        $region37: #{tpu_custom_call.1} parent=31 // pred_check
          %p195 = pneg %p73
        $region38: #{tpu_custom_call.1} parent=31 // pred_check_branch
          %197 = sbr.rel (%p195) target = $region40
        $region39: #{tpu_custom_call.1} parent=31 // pred_region
          %198 = dma.done [#allocation6], 64
        $region40: #{tpu_custom_call.1} parent=31 // pred_fallthru
          _
        // Predicated region
        $region41: #{tpu_custom_call.1} parent=31 // pred_check
          %p199 = pneg %p99
        $region42: #{tpu_custom_call.1} parent=31 // pred_check_branch
          %201 = sbr.rel (%p199) target = $region44
        $region43: #{tpu_custom_call.1} parent=31 // pred_region
          %202 = dma.done [#allocation6], 704
        $region44: #{tpu_custom_call.1} parent=31 // pred_fallthru
          _
        %p203 = pneg %p52
        %p204 = pneg %p49
        %p205 = pneg %p73
        %p206 = pneg %p70
        %p207 = pneg %p99
        %p208 = pneg %p96
        %p209 = pneg %p127
        %p210 = pneg %p124
        %s211 = sand.u32 %s114, 1
        %s212 = scalar_lea.sflag [#allocation4], %s211
        %s213 = sand.u32 %s114, 1
        %s214 = smul.addr %s213, 128
        %s215 = scalar_lea.vmem [#allocation8], %s214
        %s216 = smul.u32 2, %s23
        %s217 = ssub.s32 3, %s216
        %p218 = scmp.lt.s32.totalorder %s217, 2
        %s219 = scalar_select %p218, %s217, 2
        %s220 = smul.u32 64, %s219
        %s221 = smul.u32 %s220, 16
        %v222 = vld [vmem:[#allocation2] sm:$0xf]
        %223 = vst [vmem:[%s215] sm:$0xf] %v222
        %224 = vst [vmem:[%s215 + $0x40] sm:$0xf] %v222
        %v225 = vld [vmem:[#allocation5] sm:$0xf]
        %v227 = vlaneseq
        %v228 = vshrl.u32 %v227, 7
        %v229 = vsub.s32 0, %v228
        %v230 = vrot.slane %v225, %v229
        %v231 = vlaneseq
        %v232 = vshrl.u32 %v231, 7
        %v233 = vsub.s32 1, %v232
        %v234 = vrot.slane %v225, %v233
        %v235 = vlaneseq
        %v236 = vshrl.u32 %v235, 7
        %v237 = vsub.s32 2, %v236
        %v238 = vrot.slane %v225, %v237
        %v239 = vlaneseq
        %v240 = vshrl.u32 %v239, 7
        %v241 = vsub.s32 3, %v240
        %v242 = vrot.slane %v225, %v241
        %v243 = vcombine.low %v230, %v234
        %v244 = vcombine.low %v238, %v242
        %247 = vst [vmem:[%s215 + $0x4] sm:$0xff] %v243
        %248 = vst [vmem:[%s215 + $0xc] sm:$0xff] %v244
        %249 = vst [vmem:[%s215 + $0x44] sm:$0xff] %v243
        %250 = vst [vmem:[%s215 + $0x4c] sm:$0xff] %v244
        %v251 = vld [vmem:[#allocation7] sm:$0xff]
        %v252 = vld [vmem:[#allocation7 + $0x8] sm:$0xff]
        %v253 = vld [vmem:[#allocation7 + $0x10] sm:$0xff]
        %v254 = vld [vmem:[#allocation7 + $0x18] sm:$0xff]
        %v255 = vld [vmem:[#allocation7 + $0x20] sm:$0xff]
        %v256 = vld [vmem:[#allocation7 + $0x28] sm:$0xf]
        %257 = vst [vmem:[%s215 + $0x14] sm:$0xff] %v251
        %258 = vst [vmem:[%s215 + $0x1c] sm:$0xff] %v252
        %259 = vst [vmem:[%s215 + $0x24] sm:$0xff] %v253
        %260 = vst [vmem:[%s215 + $0x2c] sm:$0xff] %v254
        %261 = vst [vmem:[%s215 + $0x34] sm:$0xff] %v255
        %262 = vst [vmem:[%s215 + $0x3c] sm:$0xf] %v256
        %263 = vst [vmem:[%s215 + $0x54] sm:$0xff] %v251
        %264 = vst [vmem:[%s215 + $0x5c] sm:$0xff] %v252
        %265 = vst [vmem:[%s215 + $0x64] sm:$0xff] %v253
        %266 = vst [vmem:[%s215 + $0x6c] sm:$0xff] %v254
        %267 = vst [vmem:[%s215 + $0x74] sm:$0xff] %v255
        %268 = vst [vmem:[%s215 + $0x7c] sm:$0xf] %v256
        %s269 = sand.u32 %s114, 1
        %s270 = scalar_lea.sflag [#allocation4], %s269
        %s271 = sand.u32 %s114, 1
        %s272 = smul.addr %s271, 128
        %s273 = scalar_lea.vmem [#allocation8], %s272
        // Predicated region
        $region45: #{tpu_custom_call.1} parent=31 // pred_check
          %p274 = pneg %p124
        $region46: #{tpu_custom_call.1} parent=31 // pred_check_branch
          %276 = sbr.rel (%p274) target = $region48
        $region47: #{tpu_custom_call.1} parent=31 // pred_region
          %s277 = smul.u32 2, %s23
          %s278 = ssub.s32 3, %s277
          %p279 = scmp.lt.s32.totalorder %s278, 2
          %s280 = scalar_select %p279, %s278, 2
          %s281 = smul.u32 64, %s280
          %s282 = smul.u32 %s281, 16
          %s284 = ssub.s32 2048, %s282
          %285 = vsyncadd %s270, %s284
          %p286 = scmp.ne.s32.totalorder 0, %s282
          %s287 = smul.addr %s24, 16
          %s288 = smul.addr %s277, 16
          %s289 = sadd.s32 %s287, %s288
          %s290 = smul.addr %s289, 64
          %s291 = scalar_lea.hbm %s3, %s290
          %s292 = smul.u32 64, %s280
          %s293 = sshll.u32 %s273, 4
          %s294 = int_to_ptr.vmem [resolvable:$true] %s293
          %s295 = sshll.u32 %s292, 4
          %299 = dma.vmem_to_hbm [thread:$0]  (%p286), %s294, %s295, %s291, %s270, 1024, 1024, 64
        $region48: #{tpu_custom_call.1} parent=31 // pred_fallthru
          _
      $region32: #{tpu_custom_call.1} parent=5 // pred_fallthru
        _
      %p300 = scmp.le.s32.totalorder 2, %s14
      // Predicated region
      $region49: #{tpu_custom_call.1} parent=5 // pred_check
        %p301 = pneg %p300
      $region50: #{tpu_custom_call.1} parent=5 // pred_check_branch
        %303 = sbr.rel (%p301) target = $region52
      $region51: #{tpu_custom_call.1} parent=5 // pred_region
        %s304 = ssub.s32 %s14, 2
        // Predicated region
        $region53: #{tpu_custom_call.1} parent=51 // pred_check
          %p305 = pneg %p130
        $region54: #{tpu_custom_call.1} parent=51 // pred_check_branch
          %307 = sbr.rel (%p305) target = $region56
        $region55: #{tpu_custom_call.1} parent=51 // pred_region
          %s308 = sand.u32 %s115, 1
          %s309 = scalar_lea.sflag [#allocation4], %s308
          %s310 = sand.u32 %s115, 1
          %s311 = smul.addr %s310, 128
          %s312 = scalar_lea.vmem [#allocation8], %s311
          %313 = dma.done %s309, 2048
        $region56: #{tpu_custom_call.1} parent=51 // pred_fallthru
          _
      $region52: #{tpu_custom_call.1} parent=5 // pred_fallthru
        _
    $region6: #{tpu_custom_call.1} parent=1 // loop_footer
      %s18 = sadd.s32 1, %s14
    $region7: #{tpu_custom_call.1} parent=1 // loop_footer_branch
      %13 = sbr.rel target = $region3
    $region8: #{tpu_custom_call.1} parent=1 // loop_exit
      _
    %314 = vsyncpa [#allocation3], 1
    %s315 = scalar_lea.sflag [#allocation3], 1
    %316 = vsyncpa %s315, 1
    %317 = vsyncpa [#allocation6], 1
    %318 = vsyncpa [#allocation4], 1
    %s319 = scalar_lea.sflag [#allocation4], 1
    %320 = vsyncpa %s319, 1

</llo_original>
